<compile_context>
chip_gen: v5e
topology: v5e:2x2
jax: 0.10.0
libtpu: 0.0.40
codegen_flags: <defaults>
</compile_context>

<pallas_src>
import jax
import jax.numpy as jnp
from jax import lax
from jax.experimental import pallas as pl
from jax.experimental.pallas import tpu as pltpu


def linear_gelu_kernel(x_ref, wt_ref, b_ref, o_ref):
    # (N, K) . (TM, K) contracted on K -> (N, TM) on the MXU, f32 accumulate.
    v1 = lax.dot_general(
        wt_ref[...], x_ref[...],
        dimension_numbers=(((1,), (1,)), ((), ())),
        preferred_element_type=jnp.float32,
        precision=lax.Precision.HIGHEST,
    )
    v1 = v1 + b_ref[...]                      # (N, TM) + (N, 1) lane broadcast
    # tanh-approx GELU (same math as the PyTorch module, re-associated):
    #   v7 = 0.5*v1 * (1 + tanh(0.7978845608 * (v1 + 0.044715*v1^3)))
    u = v1 * v1
    inner = (v1 * (1.0 + 0.044715 * u)) * 0.7978845608028654
    out = (0.5 * v1) * (jnp.tanh(inner) + 1.0)
    o_ref[...] = out.astype(o_ref.dtype)


def reference_forward(x, w, b):
    """Pure-XLA reference (also used for the ragged-batch tail)."""
    v1 = jnp.dot(x, w, precision=lax.Precision.HIGHEST) + b
    v2 = v1 * 0.5
    v3 = v1 + v1 * v1 * v1 * 0.044715
    v4 = v3 * 0.7978845608028654
    v5 = jnp.tanh(v4)
    return v2 * (v5 + 1.0)


def model_forward(x, w, b, *, tm=4096):
    """x: (B, 256) f32, w: (256, 2) f32, b: (2,) f32 -> (B, 2) f32."""
    B, K = x.shape
    N = w.shape[1]

    # ---- batch tiling --------------------------------------------------------
    # Lane-aligned tile (multiple of 128 so (N, TM) output stores are unmasked),
    # capped at 8192 rows so 2x double-buffered x tiles stay inside v7x VMEM.
    tm_eff = max(128, min((tm // 128) * 128, 8192))
    if B < 256:
        # Tiny batch: one full-array block (full dims are exempt from the
        # (8,128) block constraint, so B needs no rounding or padding).
        TM, grid_steps, B_main = B, 1, B
    else:
        # Prefer >= 2 grid steps so both v7x TensorCores get work.
        TM = min(tm_eff, max(128, ((B // 2) // 128) * 128))
        grid_steps = B // TM
        B_main = grid_steps * TM
    rem = B - B_main

    w_t = w.T                 # (N, K) resident contraction operand
    b2 = b.reshape(N, 1)      # (N, 1) resident bias, lane-broadcast in kernel

    # VMEM budget: 2x double-buffered x tiles + 2x (sublane-padded) out tiles.
    x_tile_bytes = TM * K * 4
    out_tile_bytes = 8 * max(TM, 128) * 4
    vmem_limit = int(min(max(2 * (x_tile_bytes + out_tile_bytes) + (2 << 20),
                             32 << 20), 48 << 20))

    cost = pl.CostEstimate(
        flops=2 * B_main * K * N + 10 * B_main * N,
        transcendentals=B_main * N,
        bytes_accessed=B_main * K * 4 + K * N * 4 + N * 4 + B_main * N * 4,
    )

    out_t = pl.pallas_call(
        linear_gelu_kernel,
        out_shape=jax.ShapeDtypeStruct((N, B_main), jnp.float32),
        grid_spec=pltpu.PrefetchScalarGridSpec(
            num_scalar_prefetch=0,
            grid=(grid_steps,),
            in_specs=[
                pl.BlockSpec((TM, K), lambda i: (i, 0)),   # streamed x tile
                pl.BlockSpec((N, K), lambda i: (0, 0)),    # resident w^T
                pl.BlockSpec((N, 1), lambda i: (0, 0)),    # resident bias
            ],
            out_specs=pl.BlockSpec((N, TM), lambda i: (0, i)),
        ),
        compiler_params=pltpu.CompilerParams(
            dimension_semantics=("parallel",),
            vmem_limit_bytes=vmem_limit,
        ),
        cost_estimate=cost,
    )(x, w_t, b2)

    out_main = out_t.T        # (B_main, N); negligible traffic

    if rem:
        # Ragged tail (< TM rows): plain XLA, no HBM-copy of the main portion.
        out_tail = reference_forward(x[B_main:], w, b)
        return jnp.concatenate([out_main, out_tail], axis=0)
    return out_main


if __name__ == "__main__":
    key = jax.random.PRNGKey(0)
    kx, kw, kb, kx2 = jax.random.split(key, 4)

    B, K, N = 8, 256, 2
    x = jax.random.normal(kx, (B, K), dtype=jnp.float32)
    # Deterministic param init mimicking nn.Linear default (uniform +/- 1/sqrt(K))
    bound = 1.0 / (K ** 0.5)
    w = jax.random.uniform(kw, (K, N), dtype=jnp.float32, minval=-bound, maxval=bound)
    b = jax.random.uniform(kb, (N,), dtype=jnp.float32, minval=-bound, maxval=bound)

    # Single-block path (production-like tiny batch).
    out = jax.block_until_ready(model_forward(x, w, b))
    ref = reference_forward(x, w, b)
    assert out.shape == (B, N)
    assert jnp.allclose(out, ref, atol=1e-5, rtol=1e-5)

    # Multi-step grid path: B2=300 with tm=128 -> TM=128, 2 parallel grid steps
    # over 256 rows + 44-row XLA tail (exercises tiling, lane-dense output, and
    # the no-pad ragged-batch logic cheaply).
    B2 = 300
    x2 = jax.random.normal(kx2, (B2, K), dtype=jnp.float32)
    out2 = jax.block_until_ready(model_forward(x2, w, b, tm=128))
    ref2 = reference_forward(x2, w, b)
    assert out2.shape == (B2, N)
    assert jnp.allclose(out2, ref2, atol=1e-5, rtol=1e-5)

    print("KERNEL_OK")
</pallas_src>

<mosaic_0001>
module attributes {stable_mosaic.version = 11 : i64} {
  func.func @linear_gelu_kernel(%arg0: i32, %arg1: memref<8x256xf32, #tpu.memory_space<vmem>>, %arg2: memref<2x256xf32, #tpu.memory_space<vmem>>, %arg3: memref<2x1xf32, #tpu.memory_space<vmem>>, %arg4: memref<2x8xf32, #tpu.memory_space<vmem>>) attributes {dimension_semantics = [#tpu.dimension_semantics<parallel>], iteration_bounds = array<i64: 1>, scalar_prefetch = 0 : i64, scratch_operands = 0 : i64, tpu.core_type = #tpu.core_type<tc>, window_params = [{transform_indices = @transform_0, window_bounds = array<i64: 8, 256>}, {pipeline_mode = #tpu.pipeline_mode<synchronous>, transform_indices = @transform_1, window_bounds = array<i64: 2, 256>}, {pipeline_mode = #tpu.pipeline_mode<synchronous>, transform_indices = @transform_2, window_bounds = array<i64: 2, 1>}, {transform_indices = @transform_3, window_bounds = array<i64: 2, 8>}]} {
    %c0 = arith.constant 0 : index
    %c0_0 = arith.constant 0 : index
    %0 = vector.load %arg2[%c0, %c0_0] : memref<2x256xf32, #tpu.memory_space<vmem>>, vector<2x256xf32>
    %c0_1 = arith.constant 0 : index
    %c0_2 = arith.constant 0 : index
    %1 = vector.load %arg1[%c0_1, %c0_2] : memref<8x256xf32, #tpu.memory_space<vmem>>, vector<8x256xf32>
    %cst = arith.constant dense<0.000000e+00> : vector<2x8xf32>
    %2 = tpu.matmul %0, %1, %cst {dimension_numbers = #tpu.dot_dimension_numbers<[1], [1], [0], [0], [0, 0, 1, 0], [], []>, precision = #tpu.contract_precision<fp32>} : vector<2x256xf32>, vector<8x256xf32>, vector<2x8xf32> -> vector<2x8xf32>
    %c0_3 = arith.constant 0 : index
    %c0_4 = arith.constant 0 : index
    %3 = vector.load %arg3[%c0_3, %c0_4] : memref<2x1xf32, #tpu.memory_space<vmem>>, vector<2x1xf32>
    %4 = vector.broadcast %3 : vector<2x1xf32> to vector<2x8xf32>
    %5 = arith.addf %2, %4 : vector<2x8xf32>
    %6 = arith.mulf %5, %5 : vector<2x8xf32>
    %cst_5 = arith.constant 4.471500e-02 : f32
    %7 = vector.broadcast %cst_5 : f32 to vector<2x8xf32>
    %8 = arith.mulf %7, %6 : vector<2x8xf32>
    %cst_6 = arith.constant 1.000000e+00 : f32
    %9 = vector.broadcast %cst_6 : f32 to vector<2x8xf32>
    %10 = arith.addf %9, %8 : vector<2x8xf32>
    %11 = arith.mulf %5, %10 : vector<2x8xf32>
    %cst_7 = arith.constant 0.797884583 : f32
    %12 = vector.broadcast %cst_7 : f32 to vector<2x8xf32>
    %13 = arith.mulf %11, %12 : vector<2x8xf32>
    %cst_8 = arith.constant 5.000000e-01 : f32
    %14 = vector.broadcast %cst_8 : f32 to vector<2x8xf32>
    %15 = arith.mulf %14, %5 : vector<2x8xf32>
    %16 = math.tanh %13 : vector<2x8xf32>
    %cst_9 = arith.constant 1.000000e+00 : f32
    %17 = vector.broadcast %cst_9 : f32 to vector<2x8xf32>
    %18 = arith.addf %16, %17 : vector<2x8xf32>
    %19 = arith.mulf %15, %18 : vector<2x8xf32>
    %c0_10 = arith.constant 0 : index
    %c0_11 = arith.constant 0 : index
    %20 = vector.load %arg4[%c0_10, %c0_11] : memref<2x8xf32, #tpu.memory_space<vmem>>, vector<2x8xf32>
    tpu.vector_store %arg4[%c0_10, %c0_11], %19 {strides = array<i32>} : memref<2x8xf32, #tpu.memory_space<vmem>>, vector<2x8xf32>,
    return
  }
  func.func @transform_0(%arg0: i32) -> (i32, i32) {
    %c0_i32 = arith.constant 0 : i32
    %c0_i32_0 = arith.constant 0 : i32
    return %arg0, %c0_i32 : i32, i32
  }
  func.func @transform_1(%arg0: i32) -> (i32, i32) {
    %c0_i32 = arith.constant 0 : i32
    %c0_i32_0 = arith.constant 0 : i32
    %c0_i32_1 = arith.constant 0 : i32
    return %c0_i32, %c0_i32_0 : i32, i32
  }
  func.func @transform_2(%arg0: i32) -> (i32, i32) {
    %c0_i32 = arith.constant 0 : i32
    %c0_i32_0 = arith.constant 0 : i32
    %c0_i32_1 = arith.constant 0 : i32
    return %c0_i32, %c0_i32_0 : i32, i32
  }
  func.func @transform_3(%arg0: i32) -> (i32, i32) {
    %c0_i32 = arith.constant 0 : i32
    %c0_i32_0 = arith.constant 0 : i32
    return %c0_i32, %arg0 : i32, i32
  }
}

</mosaic_0001>

<llo_original>
// kernel: tpu_custom_call.1
$region0: #{tpu_custom_call.1}
  #allocation0 [shape = 'u32[]', space=smem, size = 0x4, offset = 0x4, fixed_abs, tag = 'smem constant byte address 0x4 - core index']
  #allocation1 [shape = 'u32[72,128]{1,0:T(1,128)}', space=vmem, size = 0x9000, scoped, tag = 'internal scratch']
  %s0 = inlined_call_operand.hbm [shape: f32[8,256], index: 0, kind: input, shape index: {}]
  %s1 = inlined_call_operand.hbm [shape: f32[2,256], index: 1, kind: input, shape index: {}]
  %s2 = inlined_call_operand.vmem [shape: f32[2,1], index: 2, kind: input, shape index: {}]
  %s3 = inlined_call_operand.hbm [shape: f32[2,8], index: 3, kind: output, shape index: {}]
  %s4 = sld [smem:[#allocation0]]
  $region30: #{tpu_custom_call.1} parent=0
    _
  %s6 = ssub.s32 1, %s4
  %s7 = scalar_select 0, %s6, %s4
  $region1: #{tpu_custom_call.1} parent=0
    #allocation2 [shape = 'u8[8192]{0}', space=vmem, size = 0x2000, scoped, tag = 'input window, operand 0, single buffered']
    #allocation3 [shape = 's32[1]{0}', space=sflag, size = 0x4, scoped, tag = 'scoped memory for tpu_custom_call.1']
    #allocation4 [shape = 's32[1]{0}', space=sflag, size = 0x4, scoped, tag = 'scoped memory for tpu_custom_call.1']
    #allocation5 [shape = 'u8[2048]{0}', space=vmem, size = 0x800, scoped, tag = 'input window, operand 1, single buffered']
    #allocation6 [shape = 's32[1]{0}', space=sflag, size = 0x4, scoped, tag = 'scoped memory for tpu_custom_call.1']
    #allocation7 [shape = 'u8[1024]{0}', space=vmem, size = 0x400, scoped, tag = 'output window, operand 0, single buffered']
    %8 = vsyncpa [#allocation3], 0
    %9 = vsyncpa [#allocation6], 0
    %10 = vsyncpa [#allocation4], 0
    // Predicated region
    $region2: #{tpu_custom_call.1} parent=1 // pred_check
      _
    $region3: #{tpu_custom_call.1} parent=1 // pred_check_branch
      %12 = sbr.rel (0) target = $region5
    $region4: #{tpu_custom_call.1} parent=1 // pred_region
      %14 = vsyncadd [#allocation3], 0
      %s16 = sshll.u32 %s0, 4
      %s17 = int_to_ptr.hbm [resolvable:$true] %s16
      %s18 = sshll.u32 [#allocation2], 4
      %s19 = int_to_ptr.vmem [resolvable:$true] %s18
      %21 = dma.hbm_to_vmem [thread:$0]  %s17, 256, %s19, [#allocation3]
    $region5: #{tpu_custom_call.1} parent=1 // pred_fallthru
      _
    // Predicated region
    $region6: #{tpu_custom_call.1} parent=1 // pred_check
      _
    $region7: #{tpu_custom_call.1} parent=1 // pred_check_branch
      %23 = sbr.rel (0) target = $region9
    $region8: #{tpu_custom_call.1} parent=1 // pred_region
      %25 = vsyncadd [#allocation6], 0
      %s27 = sshll.u32 %s1, 4
      %s28 = int_to_ptr.hbm [resolvable:$true] %s27
      %s29 = sshll.u32 [#allocation5], 4
      %s30 = int_to_ptr.vmem [resolvable:$true] %s29
      %32 = dma.hbm_to_vmem [thread:$0]  %s28, 64, %s30, [#allocation6]
    $region9: #{tpu_custom_call.1} parent=1 // pred_fallthru
      _
    // Predicated region
    $region10: #{tpu_custom_call.1} parent=1 // pred_check
      _
    $region11: #{tpu_custom_call.1} parent=1 // pred_check_branch
      %34 = sbr.rel (0) target = $region13
    $region12: #{tpu_custom_call.1} parent=1 // pred_region
      _
    $region13: #{tpu_custom_call.1} parent=1 // pred_fallthru
      _
    // Predicated region
    $region14: #{tpu_custom_call.1} parent=1 // pred_check
      _
    $region15: #{tpu_custom_call.1} parent=1 // pred_check_branch
      %36 = sbr.rel (0) target = $region17
    $region16: #{tpu_custom_call.1} parent=1 // pred_region
      %38 = dma.done [#allocation3], 256
    $region17: #{tpu_custom_call.1} parent=1 // pred_fallthru
      _
    // Predicated region
    $region18: #{tpu_custom_call.1} parent=1 // pred_check
      _
    $region19: #{tpu_custom_call.1} parent=1 // pred_check_branch
      %40 = sbr.rel (0) target = $region21
    $region20: #{tpu_custom_call.1} parent=1 // pred_region
      %42 = dma.done [#allocation6], 64
    $region21: #{tpu_custom_call.1} parent=1 // pred_fallthru
      _
    %v43 = vld [vmem:[#allocation5] sm:$0xf]
    %v44 = vld [vmem:[#allocation2] sm:$0xff]
    %v45 = vld [vmem:[#allocation2 + $0x8] sm:$0xff]
    %v46 = vld [vmem:[%s2] sm:$0x3]
    %48 = vset.pattern.permute.xlu0 0
    %49 = vperm.xlu0 %48, %v46
    %v50 = vpop.permute.xlu0 %49
    %53 = vst [vmem:[#allocation1] ss:$4 sm:$0xff] %v43
    %v54 = vld.sshfl [vmem:[#allocation1] sm:$0xff pattern:$0x73625140]
    %v55 = vld.sshfl [vmem:[#allocation1 + $0x8] sm:$0xff pattern:$0x73625140]
    %58 = vmatpush.xpose.msra.mxu0 0.0
    %59 = vmatpush.xpose.msra.mxu0 0.0
    %60 = vmatpush.xpose.msra.mxu0 0.0
    %61 = vmatpush.xpose.msra.mxu0 0.0
    %62 = vmatpush.xpose.msra.mxu0 0.0
    %63 = vmatpush.xpose.msra.mxu0 0.0
    %64 = vmatpush.xpose.msra.mxu0 0.0
    %65 = vmatpush.xpose.msra.mxu0 0.0
    %66 = vmatpush.xpose.msra.mxu0 0.0
    %67 = vmatpush.xpose.msra.mxu0 0.0
    %68 = vmatpush.xpose.msra.mxu0 0.0
    %69 = vmatpush.xpose.msra.mxu0 0.0
    %70 = vmatpush.xpose.msra.mxu0 0.0
    %71 = vmatpush.xpose.msra.mxu0 0.0
    %72 = vmatpush.xpose.msra.mxu0 0.0
    %v73 = vand.u32 %v44, 4294901760
    %74 = vmatpush.xpose.msra.mxu0 %v73
    %v75 = vand.u32 %v54, 4294901760
    %v76 = vsub.f32 %v54, %v75
    %v77 = vand.u32 %v76, 4294901760
    %v78 = vsub.f32 %v76, %v77
    %v79 = vand.u32 %v78, 4294901760
    %80 = vmatmul.f32.gmra.mxu0 %v79
    %v81 = vpop.f32.mrf.mxu0
    %v82 = vadd.f32 %v50, %v81
    %83 = vdwg.mxu0
    %84 = vmatpush.xpose.msra.mxu0 0.0
    %85 = vmatpush.xpose.msra.mxu0 0.0
    %86 = vmatpush.xpose.msra.mxu0 0.0
    %87 = vmatpush.xpose.msra.mxu0 0.0
    %88 = vmatpush.xpose.msra.mxu0 0.0
    %89 = vmatpush.xpose.msra.mxu0 0.0
    %90 = vmatpush.xpose.msra.mxu0 0.0
    %91 = vmatpush.xpose.msra.mxu0 0.0
    %92 = vmatpush.xpose.msra.mxu0 0.0
    %93 = vmatpush.xpose.msra.mxu0 0.0
    %94 = vmatpush.xpose.msra.mxu0 0.0
    %95 = vmatpush.xpose.msra.mxu0 0.0
    %96 = vmatpush.xpose.msra.mxu0 0.0
    %97 = vmatpush.xpose.msra.mxu0 0.0
    %98 = vmatpush.xpose.msra.mxu0 0.0
    %v99 = vand.u32 %v44, 4294901760
    %v100 = vsub.f32 %v44, %v99
    %v101 = vand.u32 %v100, 4294901760
    %v102 = vsub.f32 %v100, %v101
    %v103 = vand.u32 %v102, 4294901760
    %104 = vmatpush.xpose.msra.mxu0 %v103
    %v105 = vand.u32 %v54, 4294901760
    %106 = vmatmul.f32.gmra.mxu0 %v105
    %v107 = vpop.f32.mrf.mxu0
    %v108 = vadd.f32 %v82, %v107
    %109 = vdwg.mxu0
    %110 = vmatpush.xpose.msra.mxu0 0.0
    %111 = vmatpush.xpose.msra.mxu0 0.0
    %112 = vmatpush.xpose.msra.mxu0 0.0
    %113 = vmatpush.xpose.msra.mxu0 0.0
    %114 = vmatpush.xpose.msra.mxu0 0.0
    %115 = vmatpush.xpose.msra.mxu0 0.0
    %116 = vmatpush.xpose.msra.mxu0 0.0
    %117 = vmatpush.xpose.msra.mxu0 0.0
    %118 = vmatpush.xpose.msra.mxu0 0.0
    %119 = vmatpush.xpose.msra.mxu0 0.0
    %120 = vmatpush.xpose.msra.mxu0 0.0
    %121 = vmatpush.xpose.msra.mxu0 0.0
    %122 = vmatpush.xpose.msra.mxu0 0.0
    %123 = vmatpush.xpose.msra.mxu0 0.0
    %124 = vmatpush.xpose.msra.mxu0 0.0
    %v125 = vand.u32 %v44, 4294901760
    %v126 = vsub.f32 %v44, %v125
    %127 = vmatpush.xpose.msra.mxu0 %v126
    %v128 = vand.u32 %v54, 4294901760
    %v129 = vsub.f32 %v54, %v128
    %130 = vmatmul.f32.gmra.mxu0 %v129
    %v131 = vpop.f32.mrf.mxu0
    %v132 = vadd.f32 %v108, %v131
    %133 = vdwg.mxu0
    %134 = vmatpush.xpose.msra.mxu0 0.0
    %135 = vmatpush.xpose.msra.mxu0 0.0
    %136 = vmatpush.xpose.msra.mxu0 0.0
    %137 = vmatpush.xpose.msra.mxu0 0.0
    %138 = vmatpush.xpose.msra.mxu0 0.0
    %139 = vmatpush.xpose.msra.mxu0 0.0
    %140 = vmatpush.xpose.msra.mxu0 0.0
    %141 = vmatpush.xpose.msra.mxu0 0.0
    %142 = vmatpush.xpose.msra.mxu0 0.0
    %143 = vmatpush.xpose.msra.mxu0 0.0
    %144 = vmatpush.xpose.msra.mxu0 0.0
    %145 = vmatpush.xpose.msra.mxu0 0.0
    %146 = vmatpush.xpose.msra.mxu0 0.0
    %147 = vmatpush.xpose.msra.mxu0 0.0
    %148 = vmatpush.xpose.msra.mxu0 0.0
    %v149 = vand.u32 %v44, 4294901760
    %150 = vmatpush.xpose.msra.mxu0 %v149
    %v151 = vand.u32 %v54, 4294901760
    %v152 = vsub.f32 %v54, %v151
    %v153 = vand.u32 %v152, 4294901760
    %154 = vmatmul.f32.gmra.mxu0 %v153
    %v155 = vpop.f32.mrf.mxu0
    %v156 = vadd.f32 %v132, %v155
    %157 = vdwg.mxu0
    %158 = vmatpush.xpose.msra.mxu0 0.0
    %159 = vmatpush.xpose.msra.mxu0 0.0
    %160 = vmatpush.xpose.msra.mxu0 0.0
    %161 = vmatpush.xpose.msra.mxu0 0.0
    %162 = vmatpush.xpose.msra.mxu0 0.0
    %163 = vmatpush.xpose.msra.mxu0 0.0
    %164 = vmatpush.xpose.msra.mxu0 0.0
    %165 = vmatpush.xpose.msra.mxu0 0.0
    %166 = vmatpush.xpose.msra.mxu0 0.0
    %167 = vmatpush.xpose.msra.mxu0 0.0
    %168 = vmatpush.xpose.msra.mxu0 0.0
    %169 = vmatpush.xpose.msra.mxu0 0.0
    %170 = vmatpush.xpose.msra.mxu0 0.0
    %171 = vmatpush.xpose.msra.mxu0 0.0
    %172 = vmatpush.xpose.msra.mxu0 0.0
    %v173 = vand.u32 %v44, 4294901760
    %v174 = vsub.f32 %v44, %v173
    %v175 = vand.u32 %v174, 4294901760
    %176 = vmatpush.xpose.msra.mxu0 %v175
    %v177 = vand.u32 %v54, 4294901760
    %178 = vmatmul.f32.gmra.mxu0 %v177
    %v179 = vpop.f32.mrf.mxu0
    %v180 = vadd.f32 %v156, %v179
    %181 = vdwg.mxu0
    %182 = vmatpush.xpose.msra.mxu0 0.0
    %183 = vmatpush.xpose.msra.mxu0 0.0
    %184 = vmatpush.xpose.msra.mxu0 0.0
    %185 = vmatpush.xpose.msra.mxu0 0.0
    %186 = vmatpush.xpose.msra.mxu0 0.0
    %187 = vmatpush.xpose.msra.mxu0 0.0
    %188 = vmatpush.xpose.msra.mxu0 0.0
    %189 = vmatpush.xpose.msra.mxu0 0.0
    %190 = vmatpush.xpose.msra.mxu0 0.0
    %191 = vmatpush.xpose.msra.mxu0 0.0
    %192 = vmatpush.xpose.msra.mxu0 0.0
    %193 = vmatpush.xpose.msra.mxu0 0.0
    %194 = vmatpush.xpose.msra.mxu0 0.0
    %195 = vmatpush.xpose.msra.mxu0 0.0
    %196 = vmatpush.xpose.msra.mxu0 0.0
    %v197 = vand.u32 %v44, 4294901760
    %198 = vmatpush.xpose.msra.mxu0 %v197
    %v199 = vand.u32 %v54, 4294901760
    %200 = vmatmul.f32.gmra.mxu0 %v199
    %v201 = vpop.f32.mrf.mxu0
    %v202 = vadd.f32 %v180, %v201
    %203 = vdwg.mxu0
    %204 = vmatpush.xpose.msra.mxu0 0.0
    %205 = vmatpush.xpose.msra.mxu0 0.0
    %206 = vmatpush.xpose.msra.mxu0 0.0
    %207 = vmatpush.xpose.msra.mxu0 0.0
    %208 = vmatpush.xpose.msra.mxu0 0.0
    %209 = vmatpush.xpose.msra.mxu0 0.0
    %210 = vmatpush.xpose.msra.mxu0 0.0
    %211 = vmatpush.xpose.msra.mxu0 0.0
    %212 = vmatpush.xpose.msra.mxu0 0.0
    %213 = vmatpush.xpose.msra.mxu0 0.0
    %214 = vmatpush.xpose.msra.mxu0 0.0
    %215 = vmatpush.xpose.msra.mxu0 0.0
    %216 = vmatpush.xpose.msra.mxu0 0.0
    %217 = vmatpush.xpose.msra.mxu0 0.0
    %218 = vmatpush.xpose.msra.mxu0 0.0
    %v219 = vand.u32 %v45, 4294901760
    %220 = vmatpush.xpose.msra.mxu0 %v219
    %v221 = vand.u32 %v55, 4294901760
    %v222 = vsub.f32 %v55, %v221
    %v223 = vand.u32 %v222, 4294901760
    %v224 = vsub.f32 %v222, %v223
    %v225 = vand.u32 %v224, 4294901760
    %226 = vmatmul.f32.gmra.mxu0 %v225
    %v227 = vpop.f32.mrf.mxu0
    %v228 = vadd.f32 %v202, %v227
    %229 = vdwg.mxu0
    %230 = vmatpush.xpose.msra.mxu0 0.0
    %231 = vmatpush.xpose.msra.mxu0 0.0
    %232 = vmatpush.xpose.msra.mxu0 0.0
    %233 = vmatpush.xpose.msra.mxu0 0.0
    %234 = vmatpush.xpose.msra.mxu0 0.0
    %235 = vmatpush.xpose.msra.mxu0 0.0
    %236 = vmatpush.xpose.msra.mxu0 0.0
    %237 = vmatpush.xpose.msra.mxu0 0.0
    %238 = vmatpush.xpose.msra.mxu0 0.0
    %239 = vmatpush.xpose.msra.mxu0 0.0
    %240 = vmatpush.xpose.msra.mxu0 0.0
    %241 = vmatpush.xpose.msra.mxu0 0.0
    %242 = vmatpush.xpose.msra.mxu0 0.0
    %243 = vmatpush.xpose.msra.mxu0 0.0
    %244 = vmatpush.xpose.msra.mxu0 0.0
    %v245 = vand.u32 %v45, 4294901760
    %v246 = vsub.f32 %v45, %v245
    %v247 = vand.u32 %v246, 4294901760
    %v248 = vsub.f32 %v246, %v247
    %v249 = vand.u32 %v248, 4294901760
    %250 = vmatpush.xpose.msra.mxu0 %v249
    %v251 = vand.u32 %v55, 4294901760
    %252 = vmatmul.f32.gmra.mxu0 %v251
    %v253 = vpop.f32.mrf.mxu0
    %v254 = vadd.f32 %v228, %v253
    %255 = vdwg.mxu0
    %256 = vmatpush.xpose.msra.mxu0 0.0
    %257 = vmatpush.xpose.msra.mxu0 0.0
    %258 = vmatpush.xpose.msra.mxu0 0.0
    %259 = vmatpush.xpose.msra.mxu0 0.0
    %260 = vmatpush.xpose.msra.mxu0 0.0
    %261 = vmatpush.xpose.msra.mxu0 0.0
    %262 = vmatpush.xpose.msra.mxu0 0.0
    %263 = vmatpush.xpose.msra.mxu0 0.0
    %264 = vmatpush.xpose.msra.mxu0 0.0
    %265 = vmatpush.xpose.msra.mxu0 0.0
    %266 = vmatpush.xpose.msra.mxu0 0.0
    %267 = vmatpush.xpose.msra.mxu0 0.0
    %268 = vmatpush.xpose.msra.mxu0 0.0
    %269 = vmatpush.xpose.msra.mxu0 0.0
    %270 = vmatpush.xpose.msra.mxu0 0.0
    %v271 = vand.u32 %v45, 4294901760
    %v272 = vsub.f32 %v45, %v271
    %273 = vmatpush.xpose.msra.mxu0 %v272
    %v274 = vand.u32 %v55, 4294901760
    %v275 = vsub.f32 %v55, %v274
    %276 = vmatmul.f32.gmra.mxu0 %v275
    %v277 = vpop.f32.mrf.mxu0
    %v278 = vadd.f32 %v254, %v277
    %279 = vdwg.mxu0
    %280 = vmatpush.xpose.msra.mxu0 0.0
    %281 = vmatpush.xpose.msra.mxu0 0.0
    %282 = vmatpush.xpose.msra.mxu0 0.0
    %283 = vmatpush.xpose.msra.mxu0 0.0
    %284 = vmatpush.xpose.msra.mxu0 0.0
    %285 = vmatpush.xpose.msra.mxu0 0.0
    %286 = vmatpush.xpose.msra.mxu0 0.0
    %287 = vmatpush.xpose.msra.mxu0 0.0
    %288 = vmatpush.xpose.msra.mxu0 0.0
    %289 = vmatpush.xpose.msra.mxu0 0.0
    %290 = vmatpush.xpose.msra.mxu0 0.0
    %291 = vmatpush.xpose.msra.mxu0 0.0
    %292 = vmatpush.xpose.msra.mxu0 0.0
    %293 = vmatpush.xpose.msra.mxu0 0.0
    %294 = vmatpush.xpose.msra.mxu0 0.0
    %v295 = vand.u32 %v45, 4294901760
    %296 = vmatpush.xpose.msra.mxu0 %v295
    %v297 = vand.u32 %v55, 4294901760
    %v298 = vsub.f32 %v55, %v297
    %v299 = vand.u32 %v298, 4294901760
    %300 = vmatmul.f32.gmra.mxu0 %v299
    %v301 = vpop.f32.mrf.mxu0
    %v302 = vadd.f32 %v278, %v301
    %303 = vdwg.mxu0
    %304 = vmatpush.xpose.msra.mxu0 0.0
    %305 = vmatpush.xpose.msra.mxu0 0.0
    %306 = vmatpush.xpose.msra.mxu0 0.0
    %307 = vmatpush.xpose.msra.mxu0 0.0
    %308 = vmatpush.xpose.msra.mxu0 0.0
    %309 = vmatpush.xpose.msra.mxu0 0.0
    %310 = vmatpush.xpose.msra.mxu0 0.0
    %311 = vmatpush.xpose.msra.mxu0 0.0
    %312 = vmatpush.xpose.msra.mxu0 0.0
    %313 = vmatpush.xpose.msra.mxu0 0.0
    %314 = vmatpush.xpose.msra.mxu0 0.0
    %315 = vmatpush.xpose.msra.mxu0 0.0
    %316 = vmatpush.xpose.msra.mxu0 0.0
    %317 = vmatpush.xpose.msra.mxu0 0.0
    %318 = vmatpush.xpose.msra.mxu0 0.0
    %v319 = vand.u32 %v45, 4294901760
    %v320 = vsub.f32 %v45, %v319
    %v321 = vand.u32 %v320, 4294901760
    %322 = vmatpush.xpose.msra.mxu0 %v321
    %v323 = vand.u32 %v55, 4294901760
    %324 = vmatmul.f32.gmra.mxu0 %v323
    %v325 = vpop.f32.mrf.mxu0
    %v326 = vadd.f32 %v302, %v325
    %327 = vdwg.mxu0
    %328 = vmatpush.xpose.msra.mxu0 0.0
    %329 = vmatpush.xpose.msra.mxu0 0.0
    %330 = vmatpush.xpose.msra.mxu0 0.0
    %331 = vmatpush.xpose.msra.mxu0 0.0
    %332 = vmatpush.xpose.msra.mxu0 0.0
    %333 = vmatpush.xpose.msra.mxu0 0.0
    %334 = vmatpush.xpose.msra.mxu0 0.0
    %335 = vmatpush.xpose.msra.mxu0 0.0
    %336 = vmatpush.xpose.msra.mxu0 0.0
    %337 = vmatpush.xpose.msra.mxu0 0.0
    %338 = vmatpush.xpose.msra.mxu0 0.0
    %339 = vmatpush.xpose.msra.mxu0 0.0
    %340 = vmatpush.xpose.msra.mxu0 0.0
    %341 = vmatpush.xpose.msra.mxu0 0.0
    %342 = vmatpush.xpose.msra.mxu0 0.0
    %v343 = vand.u32 %v45, 4294901760
    %344 = vmatpush.xpose.msra.mxu0 %v343
    %v345 = vand.u32 %v55, 4294901760
    %346 = vmatmul.f32.gmra.mxu0 %v345
    %v347 = vpop.f32.mrf.mxu0
    %v348 = vadd.f32 %v326, %v347
    %349 = vdwg.mxu0
    %v350 = vmul.f32 %v348, %v348
    %v351 = vmul.f32 %v350, 0.044715
    %v352 = vadd.f32 %v351, 1.0
    %v353 = vmul.f32 %v348, %v352
    %v354 = vmul.f32 %v353, 0.7978846
    %v355 = vmul.f32 %v348, 0.5
    %v356 = vtanh.pop %v354
    %v357 = vadd.f32 %v356, 1.0
    %v358 = vmul.f32 %v355, %v357
    %vm359 = vcmask 58368
    %360 = vst.msk [vmem:[#allocation7] sm:$0x3] %vm359, %v358
    // Predicated region
    $region22: #{tpu_custom_call.1} parent=1 // pred_check
      _
    $region23: #{tpu_custom_call.1} parent=1 // pred_check_branch
      %362 = sbr.rel (0) target = $region25
    $region24: #{tpu_custom_call.1} parent=1 // pred_region
      %364 = vsyncadd [#allocation4], 0
      %s366 = sshll.u32 [#allocation7], 4
      %s367 = int_to_ptr.vmem [resolvable:$true] %s366
      %s368 = sshll.u32 %s3, 4
      %s369 = int_to_ptr.hbm [resolvable:$true] %s368
      %371 = dma.vmem_to_hbm [thread:$0]  %s367, 32, %s369, [#allocation4]
    $region25: #{tpu_custom_call.1} parent=1 // pred_fallthru
      _
    // Predicated region
    $region26: #{tpu_custom_call.1} parent=1 // pred_check
      _
    $region27: #{tpu_custom_call.1} parent=1 // pred_check_branch
      %373 = sbr.rel (0) target = $region29
    $region28: #{tpu_custom_call.1} parent=1 // pred_region
      %375 = dma.done [#allocation4], 32
    $region29: #{tpu_custom_call.1} parent=1 // pred_fallthru
      _
    %376 = vsyncpa [#allocation3], 1
    %377 = vsyncpa [#allocation6], 1
    %378 = vsyncpa [#allocation4], 1

</llo_original>
